<compile_context>
chip_gen: v6e
topology: v6e:2x2x1
jax: 0.10.0
libtpu: 0.0.40
codegen_flags: <defaults>
</compile_context>

<pallas_src>
import functools

import jax
import jax.numpy as jnp
from jax.experimental import pallas as pl
from jax.experimental.pallas import tpu as pltpu

LANE = 128
SUBLANE = 8
# Stay well under the smallest default scoped-VMEM limit (16 MiB on v5e).
VMEM_BUDGET = 12 * 1024 * 1024


def _round_up(v, m):
    return ((v + m - 1) // m) * m


def _pad2d(x, rows, cols):
    r, c = x.shape
    return jnp.pad(x, ((0, rows - r), (0, cols - c)))


def normalized_adjacency(edge_index, num_nodes, dtype=jnp.float32):
    """Dense GCNConv propagation matrix D^{-1/2} (A + I) D^{-1/2}.

    A[dst, src] = 1 for every edge (src -> dst) in `edge_index` ([[src...],[dst...]]).
    """
    src = edge_index[0]
    dst = edge_index[1]
    a = jnp.zeros((num_nodes, num_nodes), dtype)
    a = a.at[dst, src].set(1.0)
    diag = jnp.arange(num_nodes)
    a = a.at[diag, diag].set(1.0)  # add (remaining) self-loops
    deg = jnp.sum(a, axis=1)
    d_inv_sqrt = jnp.where(deg > 0, 1.0 / jnp.sqrt(deg), 0.0)
    return a * d_inv_sqrt[:, None] * d_inv_sqrt[None, :]


# ---------------------------------------------------------------------------
# Fused path: whole network in one pallas_call (grid over layers).
# ---------------------------------------------------------------------------
def _fused_gcn_kernel(a_ref, x0_ref, w_ref, b_ref, o_ref, h_ref, *, negative_slope):
    layer = pl.program_id(0)

    @pl.when(layer == 0)
    def _():
        h_ref[...] = x0_ref[...]

    # aggregate: (Np, Np) @ (Np, F)  -- bf16 operands, f32 accumulate
    agg = jnp.dot(a_ref[...], h_ref[...], preferred_element_type=jnp.float32)
    # transform: (Np, F) @ (F, F)
    h = jnp.dot(agg.astype(jnp.bfloat16), w_ref[0], preferred_element_type=jnp.float32)
    h = h + b_ref[0]                                   # bias (f32)
    h = jnp.where(h > 0, h, negative_slope * h)        # LeakyReLU (VPU, f32)
    h_ref[...] = h.astype(h_ref.dtype)                 # bf16 activation for next layer

    @pl.when(layer == pl.num_programs(0) - 1)
    def _():
        o_ref[...] = h.astype(o_ref.dtype)


def _fused_vmem_bytes(n_pad, f_max, out_bytes):
    return (2 * n_pad * n_pad * 2          # A_hat (bf16, double buffered)
            + 2 * n_pad * f_max * 2        # X0 (bf16)
            + 2 * f_max * f_max * 2        # one layer's W (bf16)
            + 2 * f_max * 4                # one layer's bias (f32)
            + 2 * n_pad * f_max * out_bytes  # output
            + n_pad * f_max * 2            # h scratch (bf16)
            + 2 * n_pad * f_max * 4)       # in-kernel f32 temporaries (agg, h)


def _fused_forward(a_p, x0_p, w_stack, b_stack, *, out_dtype, negative_slope):
    n_pad = a_p.shape[0]
    f_max = x0_p.shape[1]
    num_layers = w_stack.shape[0]

    flops = num_layers * (2 * n_pad * n_pad * f_max + 2 * n_pad * f_max * f_max)
    bytes_accessed = int(
        sum(arr.size * arr.dtype.itemsize for arr in (a_p, x0_p, w_stack, b_stack))
        + n_pad * f_max * jnp.dtype(out_dtype).itemsize
    )

    kernel = functools.partial(_fused_gcn_kernel, negative_slope=negative_slope)
    return pl.pallas_call(
        kernel,
        out_shape=jax.ShapeDtypeStruct((n_pad, f_max), out_dtype),
        grid_spec=pltpu.PrefetchScalarGridSpec(
            num_scalar_prefetch=0,
            grid=(num_layers,),
            in_specs=[
                pl.BlockSpec((n_pad, n_pad), lambda l: (0, 0)),        # A_hat (resident)
                pl.BlockSpec((n_pad, f_max), lambda l: (0, 0)),        # X0 (resident)
                pl.BlockSpec((1, f_max, f_max), lambda l: (l, 0, 0)),  # W_l (pipelined)
                pl.BlockSpec((1, 1, f_max), lambda l: (l, 0, 0)),      # b_l (pipelined)
            ],
            out_specs=pl.BlockSpec((n_pad, f_max), lambda l: (0, 0)),  # resident, written last
            scratch_shapes=[pltpu.VMEM((n_pad, f_max), jnp.bfloat16)],
        ),
        compiler_params=pltpu.CompilerParams(dimension_semantics=("arbitrary",)),
        cost_estimate=pl.CostEstimate(
            flops=int(flops), transcendentals=0, bytes_accessed=bytes_accessed),
    )(a_p, x0_p, w_stack, b_stack)


# ---------------------------------------------------------------------------
# Tiled fallback path: one pallas_call per layer, row-tiled over nodes.
# ---------------------------------------------------------------------------
def _gcn_layer_kernel(a_ref, x_ref, w_ref, b_ref, o_ref, *, negative_slope):
    agg = jnp.dot(a_ref[...], x_ref[...], preferred_element_type=jnp.float32)
    h = jnp.dot(agg.astype(jnp.bfloat16), w_ref[...], preferred_element_type=jnp.float32)
    h = h + b_ref[...]
    o_ref[...] = jnp.where(h > 0, h, negative_slope * h).astype(o_ref.dtype)


def _choose_node_tile(n_pad, f_in, f_out, requested, out_bytes):
    """Multiple of 8, leaves >= 2 grid steps when possible, fits VMEM budget."""
    tile = max(SUBLANE, min(requested, n_pad))
    tile = (tile // SUBLANE) * SUBLANE
    if n_pad >= 2 * SUBLANE:
        half = _round_up(-(-n_pad // 2), SUBLANE)
        tile = min(tile, half)

    def working_set(t):
        return (2 * t * n_pad * 2            # A_hat row tile (bf16, x2 buffers)
                + 2 * n_pad * f_in * 2       # full X (bf16, x2 buffers)
                + 2 * f_in * f_out * 2       # W (bf16)
                + 2 * f_out * 4              # bias (f32)
                + 2 * t * f_out * out_bytes  # output tile
                + t * (f_in + f_out) * 4)    # in-kernel f32 temporaries

    while tile > SUBLANE and working_set(tile) > VMEM_BUDGET:
        tile = max(SUBLANE, ((tile // 2) // SUBLANE) * SUBLANE)
    return tile


def _gcn_layer(a_hat_p, x_p, w_p, b_p, *, tile, out_dtype, negative_slope):
    n_pad = a_hat_p.shape[0]
    f_in = x_p.shape[1]
    f_out = w_p.shape[1]
    grid = (n_pad // tile,)

    flops = 2 * n_pad * n_pad * f_in + 2 * n_pad * f_in * f_out
    bytes_accessed = int(
        a_hat_p.size * a_hat_p.dtype.itemsize
        + x_p.size * x_p.dtype.itemsize
        + w_p.size * w_p.dtype.itemsize
        + b_p.size * b_p.dtype.itemsize
        + n_pad * f_out * jnp.dtype(out_dtype).itemsize
    )

    kernel = functools.partial(_gcn_layer_kernel, negative_slope=negative_slope)
    return pl.pallas_call(
        kernel,
        out_shape=jax.ShapeDtypeStruct((n_pad, f_out), out_dtype),
        grid_spec=pltpu.PrefetchScalarGridSpec(
            num_scalar_prefetch=0,
            grid=grid,
            in_specs=[
                pl.BlockSpec((tile, n_pad), lambda i: (i, 0)),   # A_hat row tile
                pl.BlockSpec((n_pad, f_in), lambda i: (0, 0)),   # full X (resident)
                pl.BlockSpec((f_in, f_out), lambda i: (0, 0)),   # W (resident)
                pl.BlockSpec((1, f_out), lambda i: (0, 0)),      # b (resident)
            ],
            out_specs=pl.BlockSpec((tile, f_out), lambda i: (i, 0)),
        ),
        compiler_params=pltpu.CompilerParams(dimension_semantics=("parallel",)),
        cost_estimate=pl.CostEstimate(
            flops=int(flops), transcendentals=0, bytes_accessed=bytes_accessed),
    )(a_hat_p, x_p, w_p, b_p)


def _tiled_forward(a_hat, x, params, *, out_dtype, node_tile, negative_slope):
    n = x.shape[0]
    dims = [x.shape[1]] + [w.shape[1] for w, _ in params]
    f_max = _round_up(max(dims), LANE)
    n_pad8 = _round_up(n, SUBLANE)
    out_bytes = max(jnp.dtype(out_dtype).itemsize, 4)
    tile = _choose_node_tile(n_pad8, f_max, f_max, node_tile, out_bytes)
    n_pad = _round_up(n_pad8, tile)   # tile divides n_pad exactly

    a_p = _pad2d(a_hat, n_pad, n_pad).astype(jnp.bfloat16)
    h = _pad2d(x.astype(jnp.float32), n_pad, _round_up(x.shape[1], LANE)).astype(jnp.bfloat16)

    num_layers = len(params)
    for li, (w, b) in enumerate(params):
        f_out = w.shape[1]
        f_in_pad = h.shape[1]
        f_out_pad = _round_up(f_out, LANE)
        w_p = _pad2d(w.astype(jnp.float32), f_in_pad, f_out_pad).astype(jnp.bfloat16)
        b_p = _pad2d(b.astype(jnp.float32).reshape(1, -1), 1, f_out_pad)
        # intermediate activations in bf16 (next layer consumes bf16 anyway);
        # final layer in the caller's dtype.
        layer_dtype = out_dtype if li == num_layers - 1 else jnp.bfloat16
        h = _gcn_layer(a_p, h, w_p, b_p, tile=tile, out_dtype=layer_dtype,
                       negative_slope=negative_slope)
    return h


# ---------------------------------------------------------------------------
# Public wrapper.
# ---------------------------------------------------------------------------
def relation_network_forward(x, edge_index, params, *, node_tile=1024,
                             negative_slope=0.01, force_tiled=False):
    """params: list of (W, b) with W of shape (in_channels, out_channels), b (1, out_channels)."""
    n = x.shape[0]
    out_dtype = x.dtype
    f_out_last = params[-1][0].shape[1]

    a_hat = normalized_adjacency(edge_index, n, dtype=jnp.float32)

    n_pad = _round_up(n, SUBLANE)
    dims = [x.shape[1]] + [w.shape[1] for w, _ in params]
    f_max = _round_up(max(dims), LANE)
    out_bytes = max(jnp.dtype(out_dtype).itemsize, 4)

    use_fused = (not force_tiled) and (
        _fused_vmem_bytes(n_pad, f_max, out_bytes) <= VMEM_BUDGET)

    if use_fused:
        a_p = _pad2d(a_hat, n_pad, n_pad).astype(jnp.bfloat16)
        x0_p = _pad2d(x.astype(jnp.float32), n_pad, f_max).astype(jnp.bfloat16)
        w_stack = jnp.stack(
            [_pad2d(w.astype(jnp.float32), f_max, f_max) for w, _ in params]
        ).astype(jnp.bfloat16)
        b_stack = jnp.stack(
            [_pad2d(b.astype(jnp.float32).reshape(1, -1), 1, f_max) for _, b in params]
        )
        out = _fused_forward(a_p, x0_p, w_stack, b_stack,
                             out_dtype=out_dtype, negative_slope=negative_slope)
    else:
        out = _tiled_forward(a_hat, x, params, out_dtype=out_dtype,
                             node_tile=node_tile, negative_slope=negative_slope)

    return out[:n, :f_out_last]


def reference_forward(x, edge_index, params, negative_slope=0.01):
    a_hat = normalized_adjacency(edge_index, x.shape[0], dtype=jnp.float32)
    h = x.astype(jnp.float32)
    for w, b in params:
        h = a_hat @ h @ w.astype(jnp.float32) + b.astype(jnp.float32).reshape(1, -1)
        h = jnp.where(h > 0, h, negative_slope * h)
    return h


if __name__ == "__main__":
    # Small shapes consistent with RelationNetwork([(8, 32), (32, 16)]).
    N_NODES = 16
    IN_FEATURES = 8
    LAYERS = [(8, 32), (32, 16)]

    key = jax.random.PRNGKey(0)
    kx, k1, kb1, k2, kb2 = jax.random.split(key, 5)

    # Node features.
    x = jax.random.normal(kx, (N_NODES, IN_FEATURES), dtype=jnp.float32)

    # Deterministic edge index (ring graph, both directions) in [[src],[dst]] format.
    idx = jnp.arange(N_NODES)
    src = jnp.concatenate([idx, (idx + 1) % N_NODES])
    dst = jnp.concatenate([(idx + 1) % N_NODES, idx])
    edge_index = jnp.stack([src, dst], axis=0)  # (2, 32)

    # Layer parameters stored as (in_channels, out_channels), i.e. W^T of nn.Linear.
    w1 = jax.random.normal(k1, LAYERS[0], dtype=jnp.float32) * 0.2
    b1 = jax.random.normal(kb1, (1, LAYERS[0][1]), dtype=jnp.float32) * 0.1
    w2 = jax.random.normal(k2, LAYERS[1], dtype=jnp.float32) * 0.2
    b2 = jax.random.normal(kb2, (1, LAYERS[1][1]), dtype=jnp.float32) * 0.1
    params = [(w1, b1), (w2, b2)]

    y_ref = reference_forward(x, edge_index, params)

    # Fused single-pallas_call path (default for VMEM-resident graphs).
    y_fused = jax.block_until_ready(relation_network_forward(x, edge_index, params))
    assert y_fused.shape == (N_NODES, LAYERS[-1][1])
    # bf16 MXU operands (f32 accumulate) => compare against the f32 reference loosely.
    assert jnp.allclose(y_fused, y_ref, atol=3e-2, rtol=3e-2), (
        float(jnp.max(jnp.abs(y_fused - y_ref))))

    # Row-tiled per-layer path (used automatically for graphs that exceed VMEM).
    y_tiled = jax.block_until_ready(
        relation_network_forward(x, edge_index, params, force_tiled=True))
    assert y_tiled.shape == (N_NODES, LAYERS[-1][1])
    assert jnp.allclose(y_tiled, y_ref, atol=3e-2, rtol=3e-2), (
        float(jnp.max(jnp.abs(y_tiled - y_ref))))

    print("KERNEL_OK")
</pallas_src>

<mosaic_0001>
module attributes {stable_mosaic.version = 11 : i64} {
  func.func @_fused_gcn_kernel(%arg0: i32, %arg1: memref<16x16xbf16, #tpu.memory_space<vmem>>, %arg2: memref<16x128xbf16, #tpu.memory_space<vmem>>, %arg3: memref<1x128x128xbf16, #tpu.memory_space<vmem>>, %arg4: memref<1x1x128xf32, #tpu.memory_space<vmem>>, %arg5: memref<16x128xf32, #tpu.memory_space<vmem>>, %arg6: memref<16x128xbf16, #tpu.memory_space<vmem>>) attributes {dimension_semantics = [#tpu.dimension_semantics<arbitrary>], iteration_bounds = array<i64: 2>, scalar_prefetch = 0 : i64, scratch_operands = 1 : i64, tpu.core_type = #tpu.core_type<tc>, window_params = [{pipeline_mode = #tpu.pipeline_mode<synchronous>, transform_indices = @transform_0, window_bounds = array<i64: 16, 16>}, {pipeline_mode = #tpu.pipeline_mode<synchronous>, transform_indices = @transform_1, window_bounds = array<i64: 16, 128>}, {transform_indices = @transform_2, window_bounds = array<i64: 1, 128, 128>}, {transform_indices = @transform_3, window_bounds = array<i64: 1, 1, 128>}, {pipeline_mode = #tpu.pipeline_mode<synchronous>, transform_indices = @transform_4, window_bounds = array<i64: 16, 128>}]} {
    %c0_i32 = arith.constant 0 : i32
    %0 = arith.cmpi eq, %arg0, %c0_i32 : i32
    %1 = arith.extui %0 : i1 to i32
    %c0_i32_0 = arith.constant 0 : i32
    %2 = arith.cmpi ne, %1, %c0_i32_0 : i32
    scf.if %2 {
      %c0_16 = arith.constant 0 : index
      %c0_17 = arith.constant 0 : index
      %24 = vector.load %arg2[%c0_16, %c0_17] : memref<16x128xbf16, #tpu.memory_space<vmem>>, vector<16x128xbf16>
      %c0_18 = arith.constant 0 : index
      %c0_19 = arith.constant 0 : index
      %25 = vector.load %arg6[%c0_18, %c0_19] : memref<16x128xbf16, #tpu.memory_space<vmem>>, vector<16x128xbf16>
      tpu.vector_store %arg6[%c0_18, %c0_19], %24 {strides = array<i32>} : memref<16x128xbf16, #tpu.memory_space<vmem>>, vector<16x128xbf16>,
    } else {
    }
    %c0 = arith.constant 0 : index
    %c0_1 = arith.constant 0 : index
    %3 = vector.load %arg1[%c0, %c0_1] : memref<16x16xbf16, #tpu.memory_space<vmem>>, vector<16x16xbf16>
    %c0_2 = arith.constant 0 : index
    %c0_3 = arith.constant 0 : index
    %4 = vector.load %arg6[%c0_2, %c0_3] : memref<16x128xbf16, #tpu.memory_space<vmem>>, vector<16x128xbf16>
    %cst = arith.constant dense<0.000000e+00> : vector<16x128xf32>
    %5 = tpu.matmul %3, %4, %cst {dimension_numbers = #tpu.dot_dimension_numbers<[1], [0], [0], [1], [0, 0, 1, 1], [], []>} : vector<16x16xbf16>, vector<16x128xbf16>, vector<16x128xf32> -> vector<16x128xf32>
    %6 = arith.truncf %5 : vector<16x128xf32> to vector<16x128xbf16>
    %c0_4 = arith.constant 0 : index
    %c0_5 = arith.constant 0 : index
    %c0_6 = arith.constant 0 : index
    %7 = vector.load %arg3[%c0_4, %c0_5, %c0_6] : memref<1x128x128xbf16, #tpu.memory_space<vmem>>, vector<1x128x128xbf16>
    %8 = vector.shape_cast %7 : vector<1x128x128xbf16> to vector<128x128xbf16>
    %cst_7 = arith.constant dense<0.000000e+00> : vector<16x128xf32>
    %9 = tpu.matmul %6, %8, %cst_7 {dimension_numbers = #tpu.dot_dimension_numbers<[1], [0], [0], [1], [0, 0, 1, 1], [], []>} : vector<16x128xbf16>, vector<128x128xbf16>, vector<16x128xf32> -> vector<16x128xf32>
    %c0_8 = arith.constant 0 : index
    %c0_9 = arith.constant 0 : index
    %c0_10 = arith.constant 0 : index
    %10 = vector.load %arg4[%c0_8, %c0_9, %c0_10] : memref<1x1x128xf32, #tpu.memory_space<vmem>>, vector<1x1x128xf32>
    %11 = vector.shape_cast %10 : vector<1x1x128xf32> to vector<1x128xf32>
    %12 = vector.broadcast %11 : vector<1x128xf32> to vector<16x128xf32>
    %13 = arith.addf %9, %12 : vector<16x128xf32>
    %cst_11 = arith.constant 0.000000e+00 : f32
    %14 = vector.broadcast %cst_11 : f32 to vector<16x128xf32>
    %15 = arith.cmpf ogt, %13, %14 : vector<16x128xf32>
    %cst_12 = arith.constant 0.00999999977 : f32
    %16 = vector.broadcast %cst_12 : f32 to vector<16x128xf32>
    %17 = arith.mulf %16, %13 : vector<16x128xf32>
    %18 = arith.select %15, %13, %17 : vector<16x128xi1>, vector<16x128xf32>
    %19 = arith.truncf %18 : vector<16x128xf32> to vector<16x128xbf16>
    %c0_13 = arith.constant 0 : index
    %c0_14 = arith.constant 0 : index
    %20 = vector.load %arg6[%c0_13, %c0_14] : memref<16x128xbf16, #tpu.memory_space<vmem>>, vector<16x128xbf16>
    tpu.vector_store %arg6[%c0_13, %c0_14], %19 {strides = array<i32>} : memref<16x128xbf16, #tpu.memory_space<vmem>>, vector<16x128xbf16>,
    %c1_i32 = arith.constant 1 : i32
    %21 = arith.cmpi eq, %arg0, %c1_i32 : i32
    %22 = arith.extui %21 : i1 to i32
    %c0_i32_15 = arith.constant 0 : i32
    %23 = arith.cmpi ne, %22, %c0_i32_15 : i32
    scf.if %23 {
      %c0_16 = arith.constant 0 : index
      %c0_17 = arith.constant 0 : index
      %24 = vector.load %arg5[%c0_16, %c0_17] : memref<16x128xf32, #tpu.memory_space<vmem>>, vector<16x128xf32>
      tpu.vector_store %arg5[%c0_16, %c0_17], %18 {strides = array<i32>} : memref<16x128xf32, #tpu.memory_space<vmem>>, vector<16x128xf32>,
    } else {
    }
    return
  }
  func.func @transform_0(%arg0: i32) -> (i32, i32) {
    %c0_i32 = arith.constant 0 : i32
    %c0_i32_0 = arith.constant 0 : i32
    %c0_i32_1 = arith.constant 0 : i32
    return %c0_i32, %c0_i32_0 : i32, i32
  }
  func.func @transform_1(%arg0: i32) -> (i32, i32) {
    %c0_i32 = arith.constant 0 : i32
    %c0_i32_0 = arith.constant 0 : i32
    %c0_i32_1 = arith.constant 0 : i32
    return %c0_i32, %c0_i32_0 : i32, i32
  }
  func.func @transform_2(%arg0: i32) -> (i32, i32, i32) {
    %c0_i32 = arith.constant 0 : i32
    %c0_i32_0 = arith.constant 0 : i32
    %c0_i32_1 = arith.constant 0 : i32
    return %arg0, %c0_i32, %c0_i32_0 : i32, i32, i32
  }
  func.func @transform_3(%arg0: i32) -> (i32, i32, i32) {
    %c0_i32 = arith.constant 0 : i32
    %c0_i32_0 = arith.constant 0 : i32
    %c0_i32_1 = arith.constant 0 : i32
    return %arg0, %c0_i32, %c0_i32_0 : i32, i32, i32
  }
  func.func @transform_4(%arg0: i32) -> (i32, i32) {
    %c0_i32 = arith.constant 0 : i32
    %c0_i32_0 = arith.constant 0 : i32
    %c0_i32_1 = arith.constant 0 : i32
    return %c0_i32, %c0_i32_0 : i32, i32
  }
}

</mosaic_0001>

<llo_original>
// kernel: tpu_custom_call.1
$region0: #{tpu_custom_call.1}
  #allocation0 [shape = 'u32[]', space=smem, size = 0x4, offset = 0x4, fixed_abs, tag = 'smem constant byte address 0x4 - core index']
  #allocation1 [shape = 'u32[144,128]{1,0:T(1,128)}', space=vmem, size = 0x12000, scoped, tag = 'internal scratch']
  #allocation2 [shape = 'bf16[16,128]{1,0:T(8,128)(2,1)}', space=vmem, size = 0x1000, scoped, tag = 'scratch operand']
  %s0 = inlined_call_operand.hbm [shape: bf16[16,16], index: 0, kind: input, shape index: {}]
  %s1 = inlined_call_operand.hbm [shape: bf16[16,128], index: 1, kind: input, shape index: {}]
  %s2 = inlined_call_operand.hbm [shape: bf16[2,128,128], index: 2, kind: input, shape index: {}]
  %s3 = inlined_call_operand.vmem [shape: f32[2,1,128], index: 3, kind: input, shape index: {}]
  %s4 = inlined_call_operand.hbm [shape: f32[16,128], index: 4, kind: output, shape index: {}]
  %s5 = sld [smem:[#allocation0]]
  $region69: #{tpu_custom_call.1} parent=0
    _
  %s7 = ssub.s32 1, %s5
  %s8 = scalar_select 0, %s7, %s5
  $region1: #{tpu_custom_call.1} parent=0
    #allocation3 [shape = 'u8[4096]{0}', space=vmem, size = 0x1000, scoped, tag = 'input window, operand 0, single buffered']
    #allocation4 [shape = 's32[2]{0}', space=sflag, size = 0x8, scoped, tag = 'scoped memory for tpu_custom_call.1']
    #allocation5 [shape = 's32[2]{0}', space=sflag, size = 0x8, scoped, tag = 'scoped memory for tpu_custom_call.1']
    #allocation6 [shape = 'u8[4096]{0}', space=vmem, size = 0x1000, scoped, tag = 'input window, operand 1, single buffered']
    #allocation7 [shape = 's32[1]{0}', space=sflag, size = 0x4, scoped, tag = 'scoped memory for tpu_custom_call.1']
    #allocation8 [shape = 'u8[65536]{0}', space=vmem, size = 0x10000, scoped, tag = 'input window, operand 2']
    #allocation9 [shape = 'u8[8192]{0}', space=vmem, size = 0x2000, scoped, tag = 'output window, operand 0, single buffered']
    %9 = vsyncpa [#allocation4], 0
    %10 = vsyncpa [#allocation7], 0
    %11 = vsyncpa [#allocation5], 0
    loop: start=0, step=1, limit=4
    $region2: #{tpu_custom_call.1} parent=1 // loop_pre_header
      _
    $region3: #{tpu_custom_call.1} parent=1 // loop_header
      %s13 = sphi 0, %s17
      %p14 = scmp.ge.s32.totalorder %s13, 4
      %s21 = sphi 0, %s21
      %s23 = sphi 0, %s21
      %s24 = sphi 0, %s23
      %s38 = sphi 0, %s24
      %s42 = sphi 0, %s42
      %s44 = sphi 0, %s42
      %s45 = sphi 0, %s44
      %s59 = sphi 0, %s45
      %s65 = sphi 0, %s67
      %s68 = sphi 0, %s65
      %s69 = sphi 0, %s68
      %s85 = sphi 0, %s69
      %s91 = sphi 0, %s93
      %s94 = sphi 0, %s91
      %s95 = sphi 0, %s94
      %s111 = sphi 0, %s95
      %s115 = sphi 0, %s115
      %s117 = sphi 0, %s115
      %s118 = sphi 0, %s117
      %s132 = sphi 0, %s118
    $region4: #{tpu_custom_call.1} parent=1 // loop_header_branch
      %16 = sbr.rel (%p14) target = $region8
    $region5: #{tpu_custom_call.1} parent=1 // loop_body
      %s18 = ssub.s32 %s13, 1
      %s19 = ssub.s32 %s13, 2
      %s20 = sadd.s32 %s13, 1
      %s22 = sadd.s32 %s21, 1
      %p25 = scmp.eq.s32.totalorder %s13, 1
      %p26 = scmp.ne.s32.totalorder %s21, %s23
      %p27 = scmp.eq.s32.totalorder %s13, 0
      %p28 = por %p26, %p27
      %p29 = scmp.ne.s32.totalorder %s21, %s23
      %p30 = scmp.eq.s32.totalorder %s18, 1
      %p31 = por %p29, %p30
      %p32 = scmp.ne.s32.totalorder %s23, %s24
      %p33 = scmp.eq.s32.totalorder %s18, 0
      %p34 = por %p32, %p33
      %p35 = scmp.ne.s32.totalorder %s23, %s24
      %p36 = scmp.eq.s32.totalorder %s19, 1
      %p37 = por %p35, %p36
      %p39 = scmp.ne.s32.totalorder %s24, %s38
      %p40 = scmp.eq.s32.totalorder %s19, 0
      %p41 = por %p39, %p40
      %s43 = sadd.s32 %s42, 1
      %p46 = scmp.eq.s32.totalorder %s13, 1
      %p47 = scmp.ne.s32.totalorder %s42, %s44
      %p48 = scmp.eq.s32.totalorder %s13, 0
      %p49 = por %p47, %p48
      %p50 = scmp.ne.s32.totalorder %s42, %s44
      %p51 = scmp.eq.s32.totalorder %s18, 1
      %p52 = por %p50, %p51
      %p53 = scmp.ne.s32.totalorder %s44, %s45
      %p54 = scmp.eq.s32.totalorder %s18, 0
      %p55 = por %p53, %p54
      %p56 = scmp.ne.s32.totalorder %s44, %s45
      %p57 = scmp.eq.s32.totalorder %s19, 1
      %p58 = por %p56, %p57
      %p60 = scmp.ne.s32.totalorder %s45, %s59
      %p61 = scmp.eq.s32.totalorder %s19, 0
      %p62 = por %p60, %p61
      %s63 = ssub.s32 %s13, %s20
      %p64 = scmp.eq.s32.totalorder %s63, 0
      %s66 = sadd.s32 %s65, 1
      %s67 = scalar_select %p64, %s65, %s66
      %p70 = pneg %p64
      %p71 = scmp.eq.s32.totalorder %s13, 1
      %p72 = por %p70, %p71
      %p73 = scmp.ne.s32.totalorder %s65, %s68
      %p74 = scmp.eq.s32.totalorder %s13, 0
      %p75 = por %p73, %p74
      %p76 = scmp.ne.s32.totalorder %s65, %s68
      %p77 = scmp.eq.s32.totalorder %s18, 1
      %p78 = por %p76, %p77
      %p79 = scmp.ne.s32.totalorder %s68, %s69
      %p80 = scmp.eq.s32.totalorder %s18, 0
      %p81 = por %p79, %p80
      %p82 = scmp.ne.s32.totalorder %s68, %s69
      %p83 = scmp.eq.s32.totalorder %s19, 1
      %p84 = por %p82, %p83
      %p86 = scmp.ne.s32.totalorder %s69, %s85
      %p87 = scmp.eq.s32.totalorder %s19, 0
      %p88 = por %p86, %p87
      %s89 = ssub.s32 %s13, %s20
      %p90 = scmp.eq.s32.totalorder %s89, 0
      %s92 = sadd.s32 %s91, 1
      %s93 = scalar_select %p90, %s91, %s92
      %p96 = pneg %p90
      %p97 = scmp.eq.s32.totalorder %s13, 1
      %p98 = por %p96, %p97
      %p99 = scmp.ne.s32.totalorder %s91, %s94
      %p100 = scmp.eq.s32.totalorder %s13, 0
      %p101 = por %p99, %p100
      %p102 = scmp.ne.s32.totalorder %s91, %s94
      %p103 = scmp.eq.s32.totalorder %s18, 1
      %p104 = por %p102, %p103
      %p105 = scmp.ne.s32.totalorder %s94, %s95
      %p106 = scmp.eq.s32.totalorder %s18, 0
      %p107 = por %p105, %p106
      %p108 = scmp.ne.s32.totalorder %s94, %s95
      %p109 = scmp.eq.s32.totalorder %s19, 1
      %p110 = por %p108, %p109
      %p112 = scmp.ne.s32.totalorder %s95, %s111
      %p113 = scmp.eq.s32.totalorder %s19, 0
      %p114 = por %p112, %p113
      %s116 = sadd.s32 %s115, 1
      %p119 = scmp.eq.s32.totalorder %s13, 1
      %p120 = scmp.ne.s32.totalorder %s115, %s117
      %p121 = scmp.eq.s32.totalorder %s13, 0
      %p122 = por %p120, %p121
      %p123 = scmp.ne.s32.totalorder %s115, %s117
      %p124 = scmp.eq.s32.totalorder %s18, 1
      %p125 = por %p123, %p124
      %p126 = scmp.ne.s32.totalorder %s117, %s118
      %p127 = scmp.eq.s32.totalorder %s18, 0
      %p128 = por %p126, %p127
      %p129 = scmp.ne.s32.totalorder %s117, %s118
      %p130 = scmp.eq.s32.totalorder %s19, 1
      %p131 = por %p129, %p130
      %p133 = scmp.ne.s32.totalorder %s118, %s132
      %p134 = scmp.eq.s32.totalorder %s19, 0
      %p135 = por %p133, %p134
      %p136 = scmp.le.s32.totalorder 1, %s13
      %p137 = scmp.lt.s32.totalorder %s13, 3
      %p138 = pnand %p136, %p137
      %p139 = pneg %p138
      // Predicated region
      $region9: #{tpu_custom_call.1} parent=5 // pred_check
        _
      $region10: #{tpu_custom_call.1} parent=5 // pred_check_branch
        %141 = sbr.rel (%p138) target = $region12
      $region11: #{tpu_custom_call.1} parent=5 // pred_region
        %s142 = ssub.s32 %s13, 1
        // Predicated region
        $region13: #{tpu_custom_call.1} parent=11 // pred_check
          %p143 = pneg %p34
        $region14: #{tpu_custom_call.1} parent=11 // pred_check_branch
          %145 = sbr.rel (%p143) target = $region16
        $region15: #{tpu_custom_call.1} parent=11 // pred_region
          %s147 = ssub.s32 128, 128
          %148 = vsyncadd [#allocation4], %s147
          %s149 = sshll.u32 [#allocation3], 4
          %s150 = int_to_ptr.vmem [resolvable:$true] %s149
          %155 = dma.hbm_to_vmem [thread:$0]  %s0, 128, %s150, [#allocation4], 64, 64, 4
        $region16: #{tpu_custom_call.1} parent=11 // pred_fallthru
          _
        // Predicated region
        $region17: #{tpu_custom_call.1} parent=11 // pred_check
          %p156 = pneg %p55
        $region18: #{tpu_custom_call.1} parent=11 // pred_check_branch
          %158 = sbr.rel (%p156) target = $region20
        $region19: #{tpu_custom_call.1} parent=11 // pred_region
          %s160 = ssub.s32 128, 128
          %161 = vsyncadd [#allocation7], %s160
          %s162 = sshll.u32 [#allocation6], 4
          %s163 = int_to_ptr.vmem [resolvable:$true] %s162
          %168 = dma.hbm_to_vmem [thread:$0]  %s1, 128, %s163, [#allocation7], 64, 64, 4
        $region20: #{tpu_custom_call.1} parent=11 // pred_fallthru
          _
      $region12: #{tpu_custom_call.1} parent=5 // pred_fallthru
        _
      %p169 = scmp.lt.s32.totalorder %s13, 2
      // Predicated region
      $region21: #{tpu_custom_call.1} parent=5 // pred_check
        %p170 = pneg %p169
      $region22: #{tpu_custom_call.1} parent=5 // pred_check_branch
        %172 = sbr.rel (%p170) target = $region24
      $region23: #{tpu_custom_call.1} parent=5 // pred_region
        // Predicated region
        $region25: #{tpu_custom_call.1} parent=23 // pred_check
          %p173 = pneg %p75
        $region26: #{tpu_custom_call.1} parent=23 // pred_check_branch
          %175 = sbr.rel (%p173) target = $region28
        $region27: #{tpu_custom_call.1} parent=23 // pred_region
          %s176 = sand.u32 %s13, 1
          %s177 = scalar_lea.sflag [#allocation4], %s176
          %s178 = sand.u32 %s65, 1
          %s179 = smul.addr %s178, 64
          %s180 = scalar_lea.vmem [#allocation8], %s179
          %s182 = ssub.s32 1024, 1024
          %183 = vsyncadd %s177, %s182
          %s184 = smul.addr %s13, 16
          %s185 = smul.addr %s184, 64
          %s186 = scalar_lea.hbm %s2, %s185
          %s187 = sshll.u32 %s180, 4
          %s188 = int_to_ptr.vmem [resolvable:$true] %s187
          %193 = dma.hbm_to_vmem [thread:$0]  %s186, 1024, %s188, %s177, 64, 64, 4
        $region28: #{tpu_custom_call.1} parent=23 // pred_fallthru
          _
        // Predicated region
        $region29: #{tpu_custom_call.1} parent=23 // pred_check
          %p194 = pneg %p101
        $region30: #{tpu_custom_call.1} parent=23 // pred_check_branch
          %196 = sbr.rel (%p194) target = $region32
        $region31: #{tpu_custom_call.1} parent=23 // pred_region
          %p197 = scmp.lt.s32.totalorder %s13, 1
          %s198 = scalar_select %p197, %s13, 1
          %s199 = scalar_lea.vmem %s3, %s198
        $region32: #{tpu_custom_call.1} parent=23 // pred_fallthru
          _
      $region24: #{tpu_custom_call.1} parent=5 // pred_fallthru
        _
      %p200 = scmp.le.s32.totalorder 1, %s13
      %p201 = scmp.lt.s32.totalorder %s13, 3
      %p202 = pnand %p200, %p201
      %p203 = pneg %p202
      // Predicated region
      $region33: #{tpu_custom_call.1} parent=5 // pred_check
        _
      $region34: #{tpu_custom_call.1} parent=5 // pred_check_branch
        %205 = sbr.rel (%p202) target = $region36
      $region35: #{tpu_custom_call.1} parent=5 // pred_region
        %s206 = ssub.s32 %s13, 1
        // Predicated region
        $region37: #{tpu_custom_call.1} parent=35 // pred_check
          %p207 = pneg %p34
        $region38: #{tpu_custom_call.1} parent=35 // pred_check_branch
          %209 = sbr.rel (%p207) target = $region40
        $region39: #{tpu_custom_call.1} parent=35 // pred_region
          %210 = dma.done [#allocation4], 128
        $region40: #{tpu_custom_call.1} parent=35 // pred_fallthru
          _
        // Predicated region
        $region41: #{tpu_custom_call.1} parent=35 // pred_check
          %p211 = pneg %p55
        $region42: #{tpu_custom_call.1} parent=35 // pred_check_branch
          %213 = sbr.rel (%p211) target = $region44
        $region43: #{tpu_custom_call.1} parent=35 // pred_region
          %214 = dma.done [#allocation7], 128
        $region44: #{tpu_custom_call.1} parent=35 // pred_fallthru
          _
        %s215 = sand.u32 %s18, 1
        %s216 = scalar_lea.sflag [#allocation4], %s215
        %s217 = sand.u32 %s68, 1
        %s218 = smul.addr %s217, 64
        %s219 = scalar_lea.vmem [#allocation8], %s218
        // Predicated region
        $region45: #{tpu_custom_call.1} parent=35 // pred_check
          %p220 = pneg %p81
        $region46: #{tpu_custom_call.1} parent=35 // pred_check_branch
          %222 = sbr.rel (%p220) target = $region48
        $region47: #{tpu_custom_call.1} parent=35 // pred_region
          %223 = dma.done %s216, 1024
        $region48: #{tpu_custom_call.1} parent=35 // pred_fallthru
          _
        %p224 = pneg %p34
        %p225 = pneg %p31
        %p226 = pneg %p55
        %p227 = pneg %p52
        %s228 = sand.u32 %s18, 1
        %s229 = scalar_lea.sflag [#allocation4], %s228
        %s230 = sand.u32 %s68, 1
        %s231 = smul.addr %s230, 64
        %s232 = scalar_lea.vmem [#allocation8], %s231
        %p233 = pneg %p81
        %p234 = pneg %p78
        %p235 = scmp.lt.s32.totalorder %s18, 1
        %s236 = scalar_select %p235, %s18, 1
        %s237 = scalar_lea.vmem %s3, %s236
        %p238 = pneg %p107
        %p239 = pneg %p104
        %p240 = pneg %p128
        %p241 = pneg %p125
        %p242 = scmp.lt.s32.totalorder %s18, 1
        %s243 = scalar_select %p242, %s18, 1
        %s244 = scalar_lea.vmem %s3, %s243
        %p246 = scmp.eq.s32.totalorder %s18, 0
        // Predicated region
        $region49: #{tpu_custom_call.1} parent=35 // pred_check
          %p247 = pneg %p246
        $region50: #{tpu_custom_call.1} parent=35 // pred_check_branch
          %249 = sbr.rel (%p247) target = $region52
        $region51: #{tpu_custom_call.1} parent=35 // pred_region
          %v250 = vld [vmem:[#allocation6] sm:$0xf]
          %v251 = vld [vmem:[#allocation6 + $0x4] sm:$0xf]
          %252 = vst [vmem:[#allocation2] sm:$0xf] %v250
          %253 = vst [vmem:[#allocation2 + $0x4] sm:$0xf] %v251
        $region52: #{tpu_custom_call.1} parent=35 // pred_fallthru
          _
        %v254 = vld [vmem:[#allocation3] sm:$0xf]
        %v255 = vld [vmem:[#allocation3 + $0x4] sm:$0xf]
        %v256 = vld [vmem:[#allocation2] sm:$0xf]
        %v257 = vld [vmem:[#allocation2 + $0x4] sm:$0xf]
        %v260 = vunpack.c.l.b16 %v254
        %v261 = vunpack.c.l.b16 %v255
        %v262 = vpack.c.b16 %v261, %v260
        %v265 = vunpack.c.l.b16 %v256
        %v266 = vunpack.c.l.b16 %v257
        %v267 = vpack.c.b16 %v266, %v265
        %vm269 = vcmask 130048
        %v271 = vsel %vm269, %v262, 0
        %273 = vmatprep.subr.bf16.mxu0 0
        %274 = vmatpush1.bf16.msra.mxu0 0
        %275 = vmatprep.subr.bf16.mxu0 0
        %276 = vmatpush1.bf16.msra.mxu0 0
        %277 = vmatprep.subr.bf16.mxu0 0
        %278 = vmatpush1.bf16.msra.mxu0 0
        %279 = vmatprep.subr.bf16.mxu0 0
        %280 = vmatpush1.bf16.msra.mxu0 0
        %281 = vmatprep.subr.bf16.mxu0 0
        %282 = vmatpush1.bf16.msra.mxu0 0
        %283 = vmatprep.subr.bf16.mxu0 0
        %284 = vmatpush1.bf16.msra.mxu0 0
        %285 = vmatprep.subr.bf16.mxu0 0
        %286 = vmatpush1.bf16.msra.mxu0 0
        %287 = vmatprep.subr.bf16.mxu0 0
        %288 = vmatpush1.bf16.msra.mxu0 %v267
        %289 = vmatprep.subr.bf16.mxu0 0
        %290 = vmatpush2.bf16.msra.mxu0 0
        %291 = vmatprep.subr.bf16.mxu0 0
        %292 = vmatpush2.bf16.msra.mxu0 0
        %293 = vmatprep.subr.bf16.mxu0 0
        %294 = vmatpush2.bf16.msra.mxu0 0
        %295 = vmatprep.subr.bf16.mxu0 0
        %296 = vmatpush2.bf16.msra.mxu0 0
        %297 = vmatprep.subr.bf16.mxu0 0
        %298 = vmatpush2.bf16.msra.mxu0 0
        %299 = vmatprep.subr.bf16.mxu0 0
        %300 = vmatpush2.bf16.msra.mxu0 0
        %301 = vmatprep.subr.bf16.mxu0 0
        %302 = vmatpush2.bf16.msra.mxu0 0
        %303 = vmatprep.subr.bf16.mxu0 0
        %304 = vmatpush2.bf16.msra.mxu0 0
        %305 = vmatprep.mubr.bf16.mxu0 0
        %306 = vmatmul.mubr.bf16.gmra.mxu0 %v271
        %v307 = vpop.f32.mrf.mxu0
        %v308 = vadd.f32 0.0, %v307
        %v309 = vpop.f32.mrf.mxu0
        %v310 = vpop.f32.mrf.mxu0
        %v311 = vadd.f32 0.0, %v310
        %v312 = vpop.f32.mrf.mxu0
        %313 = vdwg.mxu0
        %v314 = vpack.c.bf16 %v311, %v308
        %v315 = vld [vmem:[%s219] sm:$0xf]
        %v316 = vld [vmem:[%s219 + $0x4] sm:$0xf]
        %v317 = vld [vmem:[%s219 + $0x8] sm:$0xf]
        %v318 = vld [vmem:[%s219 + $0xc] sm:$0xf]
        %v319 = vld [vmem:[%s219 + $0x10] sm:$0xf]
        %v320 = vld [vmem:[%s219 + $0x14] sm:$0xf]
        %v321 = vld [vmem:[%s219 + $0x18] sm:$0xf]
        %v322 = vld [vmem:[%s219 + $0x1c] sm:$0xf]
        %v323 = vld [vmem:[%s219 + $0x20] sm:$0xf]
        %v324 = vld [vmem:[%s219 + $0x24] sm:$0xf]
        %v325 = vld [vmem:[%s219 + $0x28] sm:$0xf]
        %v326 = vld [vmem:[%s219 + $0x2c] sm:$0xf]
        %v327 = vld [vmem:[%s219 + $0x30] sm:$0xf]
        %v328 = vld [vmem:[%s219 + $0x34] sm:$0xf]
        %v329 = vld [vmem:[%s219 + $0x38] sm:$0xf]
        %v330 = vld [vmem:[%s219 + $0x3c] sm:$0xf]
        %v331 = vld [vmem:[%s244] sm:$0x1]
        %v333 = vlaneseq
        %v334 = vshrl.u32 %v333, 7
        %v335 = vsub.s32 0, %v334
        %v336 = vrot.slane %v331, %v335
        %v354 = vunpack.c.l.b16 %v315
        %v355 = vunpack.c.l.b16 %v316
        %v356 = vunpack.c.l.b16 %v317
        %v357 = vunpack.c.l.b16 %v318
        %v358 = vunpack.c.l.b16 %v319
        %v359 = vunpack.c.l.b16 %v320
        %v360 = vunpack.c.l.b16 %v321
        %v361 = vunpack.c.l.b16 %v322
        %v362 = vunpack.c.l.b16 %v323
        %v363 = vunpack.c.l.b16 %v324
        %v364 = vunpack.c.l.b16 %v325
        %v365 = vunpack.c.l.b16 %v326
        %v366 = vunpack.c.l.b16 %v327
        %v367 = vunpack.c.l.b16 %v328
        %v368 = vunpack.c.l.b16 %v329
        %v369 = vunpack.c.l.b16 %v330
        %v370 = vpack.c.b16 %v355, %v354
        %v371 = vpack.c.b16 %v357, %v356
        %v372 = vpack.c.b16 %v359, %v358
        %v373 = vpack.c.b16 %v361, %v360
        %v374 = vpack.c.b16 %v363, %v362
        %v375 = vpack.c.b16 %v365, %v364
        %v376 = vpack.c.b16 %v367, %v366
        %v377 = vpack.c.b16 %v369, %v368
        %386 = vmatprep.subr.bf16.mxu0 0
        %387 = vmatpush1.bf16.msra.mxu0 %v377
        %388 = vmatprep.subr.bf16.mxu0 0
        %389 = vmatpush1.bf16.msra.mxu0 %v376
        %390 = vmatprep.subr.bf16.mxu0 0
        %391 = vmatpush1.bf16.msra.mxu0 %v375
        %392 = vmatprep.subr.bf16.mxu0 0
        %393 = vmatpush1.bf16.msra.mxu0 %v374
        %394 = vmatprep.subr.bf16.mxu0 0
        %395 = vmatpush1.bf16.msra.mxu0 %v373
        %396 = vmatprep.subr.bf16.mxu0 0
        %397 = vmatpush1.bf16.msra.mxu0 %v372
        %398 = vmatprep.subr.bf16.mxu0 0
        %399 = vmatpush1.bf16.msra.mxu0 %v371
        %400 = vmatprep.subr.bf16.mxu0 0
        %401 = vmatpush1.bf16.msra.mxu0 %v370
        %402 = vmatprep.subr.bf16.mxu0 0
        %403 = vmatpush2.bf16.msra.mxu0 0
        %404 = vmatprep.subr.bf16.mxu0 0
        %405 = vmatpush2.bf16.msra.mxu0 0
        %406 = vmatprep.subr.bf16.mxu0 0
        %407 = vmatpush2.bf16.msra.mxu0 0
        %408 = vmatprep.subr.bf16.mxu0 0
        %409 = vmatpush2.bf16.msra.mxu0 0
        %410 = vmatprep.subr.bf16.mxu0 0
        %411 = vmatpush2.bf16.msra.mxu0 0
        %412 = vmatprep.subr.bf16.mxu0 0
        %413 = vmatpush2.bf16.msra.mxu0 0
        %414 = vmatprep.subr.bf16.mxu0 0
        %415 = vmatpush2.bf16.msra.mxu0 0
        %416 = vmatprep.subr.bf16.mxu0 0
        %417 = vmatpush2.bf16.msra.mxu0 0
        %418 = vmatprep.mubr.bf16.mxu0 0
        %419 = vmatmul.mubr.bf16.gmra.mxu0 %v314
        %v420 = vpop.f32.mrf.mxu0
        %v421 = vadd.f32 %v336, %v420
        %v422 = vpop.f32.mrf.mxu0
        %v423 = vpop.f32.mrf.mxu0
        %v424 = vadd.f32 %v336, %v423
        %v425 = vpop.f32.mrf.mxu0
        %426 = vdwg.mxu0
        %vm427 = vcmp.gt.f32.partialorder %v421, 0.0
        %vm428 = vcmp.gt.f32.partialorder %v424, 0.0
        %v429 = vmul.f32 %v421, 0.01
        %v430 = vmul.f32 %v424, 0.01
        %v431 = vsel %vm427, %v421, %v429
        %v432 = vsel %vm428, %v424, %v430
        %v433 = vpack.c.bf16 %v432, %v431
        %v435 = vunpack.c.l.b16 %v433
        %v436 = vunpack.c.h.b16 %v433
        %v437 = vpack.c.b16 %v435, %v435
        %v438 = vpack.c.b16 %v436, %v436
        %441 = vst [vmem:[#allocation2] sm:$0xf] %v437
        %442 = vst [vmem:[#allocation2 + $0x4] sm:$0xf] %v438
        %p443 = scmp.eq.s32.totalorder %s18, 1
        // Predicated region
        $region53: #{tpu_custom_call.1} parent=35 // pred_check
          %p444 = pneg %p443
        $region54: #{tpu_custom_call.1} parent=35 // pred_check_branch
          %446 = sbr.rel (%p444) target = $region56
        $region55: #{tpu_custom_call.1} parent=35 // pred_region
          %447 = vst [vmem:[#allocation9] sm:$0xff] %v431
          %448 = vst [vmem:[#allocation9 + $0x8] sm:$0xff] %v432
        $region56: #{tpu_custom_call.1} parent=35 // pred_fallthru
          _
        // Predicated region
        $region57: #{tpu_custom_call.1} parent=35 // pred_check
          %p449 = pneg %p125
        $region58: #{tpu_custom_call.1} parent=35 // pred_check_branch
          %451 = sbr.rel (%p449) target = $region60
        $region59: #{tpu_custom_call.1} parent=35 // pred_region
          %s453 = ssub.s32 256, 256
          %454 = vsyncadd [#allocation5], %s453
          %s455 = sshll.u32 [#allocation9], 4
          %s456 = int_to_ptr.vmem [resolvable:$true] %s455
          %461 = dma.vmem_to_hbm [thread:$0]  %s456, 256, %s4, [#allocation5], 128, 128, 8
        $region60: #{tpu_custom_call.1} parent=35 // pred_fallthru
          _
        // Predicated region
        $region61: #{tpu_custom_call.1} parent=35 // pred_check
          %p462 = pneg %p125
        $region62: #{tpu_custom_call.1} parent=35 // pred_check_branch
          %464 = sbr.rel (%p462) target = $region64
        $region63: #{tpu_custom_call.1} parent=35 // pred_region
          %465 = dma.done [#allocation5], 256
        $region64: #{tpu_custom_call.1} parent=35 // pred_fallthru
          _
      $region36: #{tpu_custom_call.1} parent=5 // pred_fallthru
        _
      %p466 = scmp.le.s32.totalorder 2, %s13
      // Predicated region
      $region65: #{tpu_custom_call.1} parent=5 // pred_check
        %p467 = pneg %p466
      $region66: #{tpu_custom_call.1} parent=5 // pred_check_branch
        %469 = sbr.rel (%p467) target = $region68
      $region67: #{tpu_custom_call.1} parent=5 // pred_region
        %s470 = ssub.s32 %s13, 2
      $region68: #{tpu_custom_call.1} parent=5 // pred_fallthru
        _
    $region6: #{tpu_custom_call.1} parent=1 // loop_footer
      %s17 = sadd.s32 1, %s13
    $region7: #{tpu_custom_call.1} parent=1 // loop_footer_branch
      %12 = sbr.rel target = $region3
    $region8: #{tpu_custom_call.1} parent=1 // loop_exit
      _
    %471 = vsyncpa [#allocation4], 1
    %s472 = scalar_lea.sflag [#allocation4], 1
    %473 = vsyncpa %s472, 1
    %474 = vsyncpa [#allocation7], 1
    %475 = vsyncpa [#allocation5], 1
    %s476 = scalar_lea.sflag [#allocation5], 1
    %477 = vsyncpa %s476, 1

</llo_original>
